<compile_context>
chip_gen: v7x
topology: tpu7x:2x2x1
jax: 0.10.0
libtpu: 0.0.40
codegen_flags: <defaults>
</compile_context>

<pallas_src>
import jax
import jax.numpy as jnp
from jax.experimental import pallas as pl
from jax.experimental.pallas import tpu as pltpu


def _round_up(x: int, m: int) -> int:
    return (x + m - 1) // m * m


def _attn_classify_kernel(sim_ref, sup_ref, out_ref):
    # sim_ref: (TB, S, 1)   sup_ref: (TB, S, C)   out_ref: (TB, C)
    w = sim_ref[...].astype(jnp.float32)      # (TB, S, 1)
    sup = sup_ref[...].astype(jnp.float32)    # (TB, S, C)
    # Broadcast the per-(row, support) weight across the class (lane) axis and
    # reduce over the support (sublane) axis.  VPU multiply + XLU reduce; both
    # units have their own bundle slots, so this hides under the HBM stream.
    out_ref[...] = jnp.sum(sup * w, axis=1).astype(out_ref.dtype)


def attentional_classify(similarities: jax.Array, support_set_y: jax.Array,
                         *, block_b: int | None = None) -> jax.Array:
    """similarities: [B, S]; support_set_y: [B, S, C] -> preds: [B, C]."""
    B, S = similarities.shape
    Bs, Ss, C = support_set_y.shape
    assert B == Bs and S == Ss

    # --- batch-tile sizing -------------------------------------------------
    # Dominant VMEM consumer is the f32 support tile; account for its padded
    # in-VMEM layout (sublanes padded to 8, lanes padded to 128).
    per_row_bytes = _round_up(S, 8) * _round_up(C, 128) * 4  # f32 intermediates
    if block_b is None:
        budget = 4 * 1024 * 1024          # per support buffer (x2 double-buffered)
        tb = 512
        while tb > 8 and tb * per_row_bytes > budget:
            tb //= 2
    else:
        tb = _round_up(block_b, 8)
    tb = max(8, min(tb, _round_up(B, 8)))

    # Prefer a tile size (multiple of 8) that divides B exactly, so we never
    # have to build a zero-padded copy of the large support tensor in HBM.
    if B % 8 == 0 and B % tb != 0:
        t = tb
        while t >= 8 and B % t != 0:
            t -= 8
        if t >= min(64, B):
            tb = t

    # --- pad (fallback only) ------------------------------------------------
    B_pad = _round_up(B, tb)
    sim3 = similarities[:, :, None]           # (B, S, 1): aligns S with sup's sublanes
    sup = support_set_y
    if B_pad != B:
        sim3 = jnp.pad(sim3, ((0, B_pad - B), (0, 0), (0, 0)))
        sup = jnp.pad(sup, ((0, B_pad - B), (0, 0), (0, 0)))

    grid = (B_pad // tb,)

    out = pl.pallas_call(
        _attn_classify_kernel,
        out_shape=jax.ShapeDtypeStruct((B_pad, C), similarities.dtype),
        grid_spec=pl.GridSpec(
            grid=grid,
            in_specs=[
                # Minor dims equal the full array extents -> legal block shapes.
                pl.BlockSpec((tb, S, 1), lambda b: (b, 0, 0)),
                pl.BlockSpec((tb, S, C), lambda b: (b, 0, 0)),
            ],
            out_specs=pl.BlockSpec((tb, C), lambda b: (b, 0)),
        ),
        compiler_params=pltpu.CompilerParams(
            # Independent batch tiles: lets v7x shard the axis across its 2 TCs.
            dimension_semantics=("parallel",),
            # Usage is ~<16 MiB with the 4 MiB-per-support-buffer budget above,
            # comfortably inside every generation's scoped VMEM.
            vmem_limit_bytes=32 * 1024 * 1024,
        ),
    )(sim3, sup)

    # Torch's trailing `.squeeze()` on the [B, 1, C] bmm result yields [B, C]
    # for B, C > 1 (the case implemented here).
    return out[:B] if B_pad != B else out


if __name__ == "__main__":
    key = jax.random.PRNGKey(0)
    k1, k2 = jax.random.split(key)

    B, S, C = 2, 8, 32  # batch, sequence (support-set size), num classes

    similarities = jax.random.normal(k1, (B, S), dtype=jnp.float32)
    # One-hot support labels (any float tensor works for the bmm semantics).
    label_idx = jax.random.randint(k2, (B, S), 0, C)
    support_set_y = jax.nn.one_hot(label_idx, C, dtype=jnp.float32)

    preds = attentional_classify(similarities, support_set_y)
    preds = jax.block_until_ready(preds)

    # Reference check against plain JAX (same math as torch unsqueeze(1).bmm().squeeze()).
    ref = jnp.einsum("bs,bsc->bc", similarities, support_set_y)
    assert preds.shape == (B, C)
    assert jnp.allclose(preds, ref, atol=1e-5, rtol=1e-5)

    print("KERNEL_OK")
</pallas_src>

<mosaic_0001>
module attributes {stable_mosaic.version = 11 : i64} {
  func.func @_attn_classify_kernel(%arg0: i32, %arg1: memref<8x8x1xf32, #tpu.memory_space<vmem>>, %arg2: memref<8x8x32xf32, #tpu.memory_space<vmem>>, %arg3: memref<8x32xf32, #tpu.memory_space<vmem>>) attributes {dimension_semantics = [#tpu.dimension_semantics<parallel>], iteration_bounds = array<i64: 1>, scalar_prefetch = 0 : i64, scratch_operands = 0 : i64, tpu.core_type = #tpu.core_type<tc>, window_params = [{transform_indices = @transform_0, window_bounds = array<i64: 8, 8, 1>}, {transform_indices = @transform_1, window_bounds = array<i64: 8, 8, 32>}, {transform_indices = @transform_2, window_bounds = array<i64: 8, 32>}]} {
    %c0 = arith.constant 0 : index
    %c0_0 = arith.constant 0 : index
    %c0_1 = arith.constant 0 : index
    %0 = vector.load %arg1[%c0, %c0_0, %c0_1] : memref<8x8x1xf32, #tpu.memory_space<vmem>>, vector<8x8x1xf32>
    %c0_2 = arith.constant 0 : index
    %c0_3 = arith.constant 0 : index
    %c0_4 = arith.constant 0 : index
    %1 = vector.load %arg2[%c0_2, %c0_3, %c0_4] : memref<8x8x32xf32, #tpu.memory_space<vmem>>, vector<8x8x32xf32>
    %2 = vector.broadcast %0 : vector<8x8x1xf32> to vector<8x8x32xf32>
    %3 = arith.mulf %1, %2 : vector<8x8x32xf32>
    %cst = arith.constant dense<0.000000e+00> : vector<8x32xf32>
    %4 = vector.multi_reduction <add>, %3, %cst [1] : vector<8x8x32xf32> to vector<8x32xf32>
    %c0_5 = arith.constant 0 : index
    %c0_6 = arith.constant 0 : index
    %5 = vector.load %arg3[%c0_5, %c0_6] : memref<8x32xf32, #tpu.memory_space<vmem>>, vector<8x32xf32>
    tpu.vector_store %arg3[%c0_5, %c0_6], %4 {strides = array<i32>} : memref<8x32xf32, #tpu.memory_space<vmem>>, vector<8x32xf32>,
    return
  }
  func.func @transform_0(%arg0: i32) -> (i32, i32, i32) {
    %c0_i32 = arith.constant 0 : i32
    %c0_i32_0 = arith.constant 0 : i32
    %c0_i32_1 = arith.constant 0 : i32
    return %arg0, %c0_i32, %c0_i32_0 : i32, i32, i32
  }
  func.func @transform_1(%arg0: i32) -> (i32, i32, i32) {
    %c0_i32 = arith.constant 0 : i32
    %c0_i32_0 = arith.constant 0 : i32
    %c0_i32_1 = arith.constant 0 : i32
    return %arg0, %c0_i32, %c0_i32_0 : i32, i32, i32
  }
  func.func @transform_2(%arg0: i32) -> (i32, i32) {
    %c0_i32 = arith.constant 0 : i32
    %c0_i32_0 = arith.constant 0 : i32
    return %arg0, %c0_i32 : i32, i32
  }
}

</mosaic_0001>

<llo_original>
// kernel: tpu_custom_call.1
$region0: #{tpu_custom_call.1}
  #allocation0 [shape = 'u32[]', space=smem, size = 0x4, offset = 0x4, fixed_abs, tag = 'smem constant byte address 0x4 - core index']
  #allocation1 [shape = 'u32[144,128]{1,0:T(1,128)}', space=vmem, size = 0x12000, scoped, tag = 'internal scratch']
  %s0 = inlined_call_operand.vmem [shape: f32[8,8,1], index: 0, kind: input, shape index: {}]
  %s1 = inlined_call_operand.vmem [shape: f32[8,8,32], index: 1, kind: input, shape index: {}]
  %s2 = inlined_call_operand.hbm [shape: f32[8,32], index: 2, kind: output, shape index: {}]
  %s3 = sld [smem:[#allocation0]]
  $region18: #{tpu_custom_call.1} parent=0
    _
  %s5 = ssub.s32 1, %s3
  %s6 = scalar_select 0, %s5, %s3
  $region1: #{tpu_custom_call.1} parent=0
    #allocation2 [shape = 'u8[4096]{0}', space=vmem, size = 0x1000, scoped, tag = 'output window, operand 0, single buffered']
    #allocation3 [shape = 's32[1]{0}', space=sflag, size = 0x4, scoped, tag = 'scoped memory for tpu_custom_call.1']
    %7 = vsyncpa [#allocation3], 0
    // Predicated region
    $region2: #{tpu_custom_call.1} parent=1 // pred_check
      _
    $region3: #{tpu_custom_call.1} parent=1 // pred_check_branch
      %9 = sbr.rel (0) target = $region5
    $region4: #{tpu_custom_call.1} parent=1 // pred_region
      _
    $region5: #{tpu_custom_call.1} parent=1 // pred_fallthru
      _
    // Predicated region
    $region6: #{tpu_custom_call.1} parent=1 // pred_check
      _
    $region7: #{tpu_custom_call.1} parent=1 // pred_check_branch
      %11 = sbr.rel (0) target = $region9
    $region8: #{tpu_custom_call.1} parent=1 // pred_region
      _
    $region9: #{tpu_custom_call.1} parent=1 // pred_fallthru
      _
    %v12 = vld [vmem:[%s0] sm:$0xff]
    %v13 = vld [vmem:[%s0 + $0x8] sm:$0xff]
    %v14 = vld [vmem:[%s0 + $0x10] sm:$0xff]
    %v15 = vld [vmem:[%s0 + $0x18] sm:$0xff]
    %v16 = vld [vmem:[%s0 + $0x20] sm:$0xff]
    %v17 = vld [vmem:[%s0 + $0x28] sm:$0xff]
    %v18 = vld [vmem:[%s0 + $0x30] sm:$0xff]
    %v19 = vld [vmem:[%s0 + $0x38] sm:$0xff]
    %v20 = vld [vmem:[%s1] sm:$0xff]
    %v21 = vld [vmem:[%s1 + $0x8] sm:$0xff]
    %v22 = vld [vmem:[%s1 + $0x10] sm:$0xff]
    %v23 = vld [vmem:[%s1 + $0x18] sm:$0xff]
    %v24 = vld [vmem:[%s1 + $0x20] sm:$0xff]
    %v25 = vld [vmem:[%s1 + $0x28] sm:$0xff]
    %v26 = vld [vmem:[%s1 + $0x30] sm:$0xff]
    %v27 = vld [vmem:[%s1 + $0x38] sm:$0xff]
    %29 = vset.pattern.permute.xlu0 0
    %30 = vperm.xlu0 %29, %v12
    %v31 = vpop.permute.xlu0 %30
    %34 = vset.pattern.permute.xlu0 0
    %35 = vperm.xlu0 %34, %v13
    %v36 = vpop.permute.xlu0 %35
    %39 = vset.pattern.permute.xlu0 0
    %40 = vperm.xlu0 %39, %v14
    %v41 = vpop.permute.xlu0 %40
    %44 = vset.pattern.permute.xlu0 0
    %45 = vperm.xlu0 %44, %v15
    %v46 = vpop.permute.xlu0 %45
    %49 = vset.pattern.permute.xlu0 0
    %50 = vperm.xlu0 %49, %v16
    %v51 = vpop.permute.xlu0 %50
    %54 = vset.pattern.permute.xlu0 0
    %55 = vperm.xlu0 %54, %v17
    %v56 = vpop.permute.xlu0 %55
    %59 = vset.pattern.permute.xlu0 0
    %60 = vperm.xlu0 %59, %v18
    %v61 = vpop.permute.xlu0 %60
    %64 = vset.pattern.permute.xlu0 0
    %65 = vperm.xlu0 %64, %v19
    %v66 = vpop.permute.xlu0 %65
    %v68 = vmul.f32 %v20, %v31
    %v69 = vmul.f32 %v21, %v36
    %v70 = vmul.f32 %v22, %v41
    %v71 = vmul.f32 %v23, %v46
    %v72 = vmul.f32 %v24, %v51
    %v73 = vmul.f32 %v25, %v56
    %v74 = vmul.f32 %v26, %v61
    %v75 = vmul.f32 %v27, %v66
    %vm76 = vcmask 261120
    %v77 = vsel %vm76, %v68, 0.0
    %v78 = vrot.slane %v77, 4
    %v79 = vadd.f32 %v77, %v78
    %v80 = vrot.slane %v79, 2
    %v81 = vadd.f32 %v79, %v80
    %v82 = vrot.slane %v81, 1
    %v83 = vadd.f32 %v81, %v82
    %v84 = vsel %vm76, %v69, 0.0
    %v85 = vrot.slane %v84, 4
    %v86 = vadd.f32 %v84, %v85
    %v87 = vrot.slane %v86, 2
    %v88 = vadd.f32 %v86, %v87
    %v89 = vrot.slane %v88, 1
    %v90 = vadd.f32 %v88, %v89
    %v91 = vsel %vm76, %v70, 0.0
    %v92 = vrot.slane %v91, 4
    %v93 = vadd.f32 %v91, %v92
    %v94 = vrot.slane %v93, 2
    %v95 = vadd.f32 %v93, %v94
    %v96 = vrot.slane %v95, 1
    %v97 = vadd.f32 %v95, %v96
    %v98 = vsel %vm76, %v71, 0.0
    %v99 = vrot.slane %v98, 4
    %v100 = vadd.f32 %v98, %v99
    %v101 = vrot.slane %v100, 2
    %v102 = vadd.f32 %v100, %v101
    %v103 = vrot.slane %v102, 1
    %v104 = vadd.f32 %v102, %v103
    %v105 = vsel %vm76, %v72, 0.0
    %v106 = vrot.slane %v105, 4
    %v107 = vadd.f32 %v105, %v106
    %v108 = vrot.slane %v107, 2
    %v109 = vadd.f32 %v107, %v108
    %v110 = vrot.slane %v109, 1
    %v111 = vadd.f32 %v109, %v110
    %v112 = vsel %vm76, %v73, 0.0
    %v113 = vrot.slane %v112, 4
    %v114 = vadd.f32 %v112, %v113
    %v115 = vrot.slane %v114, 2
    %v116 = vadd.f32 %v114, %v115
    %v117 = vrot.slane %v116, 1
    %v118 = vadd.f32 %v116, %v117
    %v119 = vsel %vm76, %v74, 0.0
    %v120 = vrot.slane %v119, 4
    %v121 = vadd.f32 %v119, %v120
    %v122 = vrot.slane %v121, 2
    %v123 = vadd.f32 %v121, %v122
    %v124 = vrot.slane %v123, 1
    %v125 = vadd.f32 %v123, %v124
    %v126 = vsel %vm76, %v75, 0.0
    %v127 = vrot.slane %v126, 4
    %v128 = vadd.f32 %v126, %v127
    %v129 = vrot.slane %v128, 2
    %v130 = vadd.f32 %v128, %v129
    %v131 = vrot.slane %v130, 1
    %v132 = vadd.f32 %v130, %v131
    %vm141 = vcmask 1041409
    %v142 = vsel %vm141, %v90, %v83
    %vm143 = vcmask 1042434
    %v144 = vsel %vm143, %v97, %v142
    %vm145 = vcmask 1043459
    %v146 = vsel %vm145, %v104, %v144
    %vm147 = vcmask 1044484
    %v148 = vsel %vm147, %v111, %v146
    %vm149 = vcmask 1045509
    %v150 = vsel %vm149, %v118, %v148
    %vm151 = vcmask 1046534
    %v152 = vsel %vm151, %v125, %v150
    %vm153 = vcmask 1047559
    %v154 = vsel %vm153, %v132, %v152
    %156 = vst.msk [vmem:[#allocation2] sm:$0xff] %vm76, %v154
    // Predicated region
    $region10: #{tpu_custom_call.1} parent=1 // pred_check
      _
    $region11: #{tpu_custom_call.1} parent=1 // pred_check_branch
      %158 = sbr.rel (0) target = $region13
    $region12: #{tpu_custom_call.1} parent=1 // pred_region
      %s160 = ssub.s32 128, 128
      %161 = vsyncadd [#allocation3], %s160
      %s163 = sshll.u32 [#allocation2], 4
      %s164 = int_to_ptr.vmem [resolvable:$true] %s163
      %166 = dma.vmem_to_hbm [thread:$0]  %s164, 128, %s2, [#allocation3]
    $region13: #{tpu_custom_call.1} parent=1 // pred_fallthru
      _
    // Predicated region
    $region14: #{tpu_custom_call.1} parent=1 // pred_check
      _
    $region15: #{tpu_custom_call.1} parent=1 // pred_check_branch
      %168 = sbr.rel (0) target = $region17
    $region16: #{tpu_custom_call.1} parent=1 // pred_region
      %169 = dma.done [#allocation3], 128
    $region17: #{tpu_custom_call.1} parent=1 // pred_fallthru
      _
    %170 = vsyncpa [#allocation3], 1

</llo_original>
